<compile_context>
chip_gen: v7x
topology: tpu7x:2x2x1
jax: 0.10.0
libtpu: 0.0.40
codegen_flags: <defaults>
</compile_context>

<pallas_src>
import jax
import jax.numpy as jnp
from jax.experimental import pallas as pl
from jax.experimental.pallas import tpu as pltpu


def _mlp_kernel(x_ref, w1_ref, b1_ref, w2_ref, b2_ref, w3_ref, b3_ref, o_ref):
    """Fused 3-layer MLP on one batch tile.

    MXU operands are in the weights' dtype (bf16); accumulation, bias-add and
    ReLU are f32 on the VPU.
    """
    mm_dtype = w1_ref.dtype
    # Layer 1: Linear + ReLU
    h = jnp.dot(x_ref[...], w1_ref[...], preferred_element_type=jnp.float32)
    h = jnp.maximum(h + b1_ref[...], 0.0)
    # Layer 2: Linear + ReLU
    h = jnp.dot(h.astype(mm_dtype), w2_ref[...],
                preferred_element_type=jnp.float32)
    h = jnp.maximum(h + b2_ref[...], 0.0)
    # Layer 3 (final): Linear, no activation
    h = jnp.dot(h.astype(mm_dtype), w3_ref[...],
                preferred_element_type=jnp.float32)
    o_ref[...] = (h + b3_ref[...]).astype(o_ref.dtype)


def _round_up(v, m):
    return ((v + m - 1) // m) * m


def decoder_forward(x, params, *, tile_m=512, matmul_dtype=jnp.bfloat16):
    """Pallas-fused Decoder/MLP forward.

    x: (N, H0) float32
    params: dict with w1,b1,w2,b2,w3,b3 in PyTorch nn.Linear layout
            (w_k: (out_k, in_k), b_k: (out_k,))
    """
    w1, b1 = params["w1"], params["b1"]
    w2, b2 = params["w2"], params["b2"]
    w3, b3 = params["w3"], params["b3"]

    N, H0 = x.shape
    H1, H2, H3 = w1.shape[0], w2.shape[0], w3.shape[0]

    # Glue: transpose weights to (in, out) and cast matmul operands to bf16;
    # biases stay f32 (added to the f32 accumulator).
    w1t = w1.T.astype(matmul_dtype)
    w2t = w2.T.astype(matmul_dtype)
    w3t = w3.T.astype(matmul_dtype)
    b1r = b1[None, :].astype(jnp.float32)
    b2r = b2[None, :].astype(jnp.float32)
    b3r = b3[None, :].astype(jnp.float32)
    xc = x.astype(matmul_dtype)

    # Batch tiling: big tiles amortize per-step overhead; shrink the tile for
    # small batches.  Tiles are multiples of 16 (bf16 sublane packing), and N
    # is padded to a multiple of the tile (padded rows sliced off at the end).
    tm = min(_round_up(tile_m, 16), _round_up(max(N, 1), 16))
    n_pad = _round_up(N, tm)
    if n_pad != N:
        xc = jnp.pad(xc, ((0, n_pad - N), (0, 0)))

    grid = (n_pad // tm,)
    out = pl.pallas_call(
        _mlp_kernel,
        out_shape=jax.ShapeDtypeStruct((n_pad, H3), jnp.float32),
        grid_spec=pltpu.PrefetchScalarGridSpec(
            num_scalar_prefetch=0,
            grid=grid,
            in_specs=[
                pl.BlockSpec((tm, H0), lambda i: (i, 0)),   # x tile
                pl.BlockSpec((H0, H1), lambda i: (0, 0)),   # W1^T (resident)
                pl.BlockSpec((1, H1), lambda i: (0, 0)),    # b1   (resident)
                pl.BlockSpec((H1, H2), lambda i: (0, 0)),   # W2^T
                pl.BlockSpec((1, H2), lambda i: (0, 0)),    # b2
                pl.BlockSpec((H2, H3), lambda i: (0, 0)),   # W3^T
                pl.BlockSpec((1, H3), lambda i: (0, 0)),    # b3
            ],
            out_specs=pl.BlockSpec((tm, H3), lambda i: (i, 0)),
        ),
        compiler_params=pltpu.CompilerParams(
            dimension_semantics=("parallel",),
        ),
    )(xc, w1t, b1r, w2t, b2r, w3t, b3r)

    if n_pad != N:
        out = out[:N]
    return out.astype(x.dtype)


def _reference(x, params):
    """Pure-JAX f32 reference reproducing the PyTorch MLP semantics."""
    h = x @ params["w1"].T + params["b1"]
    h = jnp.maximum(h, 0.0)
    h = h @ params["w2"].T + params["b2"]
    h = jnp.maximum(h, 0.0)
    h = h @ params["w3"].T + params["b3"]
    return h


def _init_params(key, hidden_channels):
    """Deterministic init matching nn.Linear shapes (Kaiming-uniform-ish)."""
    params = {}
    ks = jax.random.split(key, 2 * (len(hidden_channels) - 1))
    for k in range(1, len(hidden_channels)):
        fan_in = hidden_channels[k - 1]
        fan_out = hidden_channels[k]
        bound = 1.0 / jnp.sqrt(jnp.asarray(fan_in, jnp.float32))
        wkey, bkey = ks[2 * (k - 1)], ks[2 * (k - 1) + 1]
        params[f"w{k}"] = jax.random.uniform(
            wkey, (fan_out, fan_in), jnp.float32, -bound, bound
        )
        params[f"b{k}"] = jax.random.uniform(
            bkey, (fan_out,), jnp.float32, -bound, bound
        )
    return params


if __name__ == "__main__":
    hidden_channels = [32, 64, 64, 16]   # Decoder(hidden_channels, nn.ReLU())

    key = jax.random.PRNGKey(0)
    kx, kp = jax.random.split(key)
    params = _init_params(kp, hidden_channels)

    # (batch, tile_m): multi-step grid (both TCs on v7x get work), a ragged
    # batch (exercises the pad/slice path), and a tiny batch (tile shrink).
    for batch, tile_m in ((256, 128), (300, 128), (8, 512)):
        x = jax.random.normal(
            jax.random.fold_in(kx, batch), (batch, hidden_channels[0]),
            jnp.float32,
        )
        out = jax.block_until_ready(decoder_forward(x, params, tile_m=tile_m))
        ref = _reference(x, params)
        assert out.shape == (batch, hidden_channels[-1])
        # bf16 matmul operands with f32 accumulation -> loose-ish tolerance.
        assert jnp.allclose(out, ref, atol=2e-2, rtol=2e-2), (
            f"mismatch vs reference for batch={batch}"
        )

    print("KERNEL_OK")
</pallas_src>

<mosaic_0001>
module attributes {stable_mosaic.version = 11 : i64} {
  func.func @_mlp_kernel(%arg0: i32, %arg1: memref<128x32xbf16, #tpu.memory_space<vmem>>, %arg2: memref<32x64xbf16, #tpu.memory_space<vmem>>, %arg3: memref<1x64xf32, #tpu.memory_space<vmem>>, %arg4: memref<64x64xbf16, #tpu.memory_space<vmem>>, %arg5: memref<1x64xf32, #tpu.memory_space<vmem>>, %arg6: memref<64x16xbf16, #tpu.memory_space<vmem>>, %arg7: memref<1x16xf32, #tpu.memory_space<vmem>>, %arg8: memref<128x16xf32, #tpu.memory_space<vmem>>) attributes {dimension_semantics = [#tpu.dimension_semantics<parallel>], iteration_bounds = array<i64: 2>, scalar_prefetch = 0 : i64, scratch_operands = 0 : i64, tpu.core_type = #tpu.core_type<tc>, window_params = [{transform_indices = @transform_0, window_bounds = array<i64: 128, 32>}, {pipeline_mode = #tpu.pipeline_mode<synchronous>, transform_indices = @transform_1, window_bounds = array<i64: 32, 64>}, {pipeline_mode = #tpu.pipeline_mode<synchronous>, transform_indices = @transform_2, window_bounds = array<i64: 1, 64>}, {pipeline_mode = #tpu.pipeline_mode<synchronous>, transform_indices = @transform_3, window_bounds = array<i64: 64, 64>}, {pipeline_mode = #tpu.pipeline_mode<synchronous>, transform_indices = @transform_4, window_bounds = array<i64: 1, 64>}, {pipeline_mode = #tpu.pipeline_mode<synchronous>, transform_indices = @transform_5, window_bounds = array<i64: 64, 16>}, {pipeline_mode = #tpu.pipeline_mode<synchronous>, transform_indices = @transform_6, window_bounds = array<i64: 1, 16>}, {transform_indices = @transform_7, window_bounds = array<i64: 128, 16>}]} {
    %c0 = arith.constant 0 : index
    %c0_0 = arith.constant 0 : index
    %0 = vector.load %arg1[%c0, %c0_0] : memref<128x32xbf16, #tpu.memory_space<vmem>>, vector<128x32xbf16>
    %c0_1 = arith.constant 0 : index
    %c0_2 = arith.constant 0 : index
    %1 = vector.load %arg2[%c0_1, %c0_2] : memref<32x64xbf16, #tpu.memory_space<vmem>>, vector<32x64xbf16>
    %cst = arith.constant dense<0.000000e+00> : vector<128x64xf32>
    %2 = tpu.matmul %0, %1, %cst {dimension_numbers = #tpu.dot_dimension_numbers<[1], [0], [0], [1], [0, 0, 1, 1], [], []>} : vector<128x32xbf16>, vector<32x64xbf16>, vector<128x64xf32> -> vector<128x64xf32>
    %c0_3 = arith.constant 0 : index
    %c0_4 = arith.constant 0 : index
    %3 = vector.load %arg3[%c0_3, %c0_4] : memref<1x64xf32, #tpu.memory_space<vmem>>, vector<1x64xf32>
    %4 = vector.broadcast %3 : vector<1x64xf32> to vector<128x64xf32>
    %5 = arith.addf %2, %4 : vector<128x64xf32>
    %cst_5 = arith.constant 0.000000e+00 : f32
    %6 = vector.broadcast %cst_5 : f32 to vector<128x64xf32>
    %7 = arith.maximumf %5, %6 : vector<128x64xf32>
    %8 = arith.truncf %7 : vector<128x64xf32> to vector<128x64xbf16>
    %c0_6 = arith.constant 0 : index
    %c0_7 = arith.constant 0 : index
    %9 = vector.load %arg4[%c0_6, %c0_7] : memref<64x64xbf16, #tpu.memory_space<vmem>>, vector<64x64xbf16>
    %cst_8 = arith.constant dense<0.000000e+00> : vector<128x64xf32>
    %10 = tpu.matmul %8, %9, %cst_8 {dimension_numbers = #tpu.dot_dimension_numbers<[1], [0], [0], [1], [0, 0, 1, 1], [], []>} : vector<128x64xbf16>, vector<64x64xbf16>, vector<128x64xf32> -> vector<128x64xf32>
    %c0_9 = arith.constant 0 : index
    %c0_10 = arith.constant 0 : index
    %11 = vector.load %arg5[%c0_9, %c0_10] : memref<1x64xf32, #tpu.memory_space<vmem>>, vector<1x64xf32>
    %12 = vector.broadcast %11 : vector<1x64xf32> to vector<128x64xf32>
    %13 = arith.addf %10, %12 : vector<128x64xf32>
    %cst_11 = arith.constant 0.000000e+00 : f32
    %14 = vector.broadcast %cst_11 : f32 to vector<128x64xf32>
    %15 = arith.maximumf %13, %14 : vector<128x64xf32>
    %16 = arith.truncf %15 : vector<128x64xf32> to vector<128x64xbf16>
    %c0_12 = arith.constant 0 : index
    %c0_13 = arith.constant 0 : index
    %17 = vector.load %arg6[%c0_12, %c0_13] : memref<64x16xbf16, #tpu.memory_space<vmem>>, vector<64x16xbf16>
    %cst_14 = arith.constant dense<0.000000e+00> : vector<128x16xf32>
    %18 = tpu.matmul %16, %17, %cst_14 {dimension_numbers = #tpu.dot_dimension_numbers<[1], [0], [0], [1], [0, 0, 1, 1], [], []>} : vector<128x64xbf16>, vector<64x16xbf16>, vector<128x16xf32> -> vector<128x16xf32>
    %c0_15 = arith.constant 0 : index
    %c0_16 = arith.constant 0 : index
    %19 = vector.load %arg7[%c0_15, %c0_16] : memref<1x16xf32, #tpu.memory_space<vmem>>, vector<1x16xf32>
    %20 = vector.broadcast %19 : vector<1x16xf32> to vector<128x16xf32>
    %21 = arith.addf %18, %20 : vector<128x16xf32>
    %c0_17 = arith.constant 0 : index
    %c0_18 = arith.constant 0 : index
    %22 = vector.load %arg8[%c0_17, %c0_18] : memref<128x16xf32, #tpu.memory_space<vmem>>, vector<128x16xf32>
    tpu.vector_store %arg8[%c0_17, %c0_18], %21 {strides = array<i32>} : memref<128x16xf32, #tpu.memory_space<vmem>>, vector<128x16xf32>,
    return
  }
  func.func @transform_0(%arg0: i32) -> (i32, i32) {
    %c0_i32 = arith.constant 0 : i32
    %c0_i32_0 = arith.constant 0 : i32
    return %arg0, %c0_i32 : i32, i32
  }
  func.func @transform_1(%arg0: i32) -> (i32, i32) {
    %c0_i32 = arith.constant 0 : i32
    %c0_i32_0 = arith.constant 0 : i32
    %c0_i32_1 = arith.constant 0 : i32
    return %c0_i32, %c0_i32_0 : i32, i32
  }
  func.func @transform_2(%arg0: i32) -> (i32, i32) {
    %c0_i32 = arith.constant 0 : i32
    %c0_i32_0 = arith.constant 0 : i32
    %c0_i32_1 = arith.constant 0 : i32
    return %c0_i32, %c0_i32_0 : i32, i32
  }
  func.func @transform_3(%arg0: i32) -> (i32, i32) {
    %c0_i32 = arith.constant 0 : i32
    %c0_i32_0 = arith.constant 0 : i32
    %c0_i32_1 = arith.constant 0 : i32
    return %c0_i32, %c0_i32_0 : i32, i32
  }
  func.func @transform_4(%arg0: i32) -> (i32, i32) {
    %c0_i32 = arith.constant 0 : i32
    %c0_i32_0 = arith.constant 0 : i32
    %c0_i32_1 = arith.constant 0 : i32
    return %c0_i32, %c0_i32_0 : i32, i32
  }
  func.func @transform_5(%arg0: i32) -> (i32, i32) {
    %c0_i32 = arith.constant 0 : i32
    %c0_i32_0 = arith.constant 0 : i32
    %c0_i32_1 = arith.constant 0 : i32
    return %c0_i32, %c0_i32_0 : i32, i32
  }
  func.func @transform_6(%arg0: i32) -> (i32, i32) {
    %c0_i32 = arith.constant 0 : i32
    %c0_i32_0 = arith.constant 0 : i32
    %c0_i32_1 = arith.constant 0 : i32
    return %c0_i32, %c0_i32_0 : i32, i32
  }
  func.func @transform_7(%arg0: i32) -> (i32, i32) {
    %c0_i32 = arith.constant 0 : i32
    %c0_i32_0 = arith.constant 0 : i32
    return %arg0, %c0_i32 : i32, i32
  }
}

</mosaic_0001>

<llo_original>
// kernel: tpu_custom_call.1
$region0: #{tpu_custom_call.1}
  #allocation0 [shape = 'u32[]', space=smem, size = 0x4, offset = 0x4, fixed_abs, tag = 'smem constant byte address 0x4 - core index']
  #allocation1 [shape = 'u32[144,128]{1,0:T(1,128)}', space=vmem, size = 0x12000, scoped, tag = 'internal scratch']
  %s0 = inlined_call_operand.vmem [shape: bf16[256,32], index: 0, kind: input, shape index: {}]
  %s1 = inlined_call_operand.vmem [shape: bf16[32,64], index: 1, kind: input, shape index: {}]
  %s2 = inlined_call_operand.vmem [shape: f32[1,64], index: 2, kind: input, shape index: {}]
  %s3 = inlined_call_operand.vmem [shape: bf16[64,64], index: 3, kind: input, shape index: {}]
  %s4 = inlined_call_operand.vmem [shape: f32[1,64], index: 4, kind: input, shape index: {}]
  %s5 = inlined_call_operand.vmem [shape: bf16[64,16], index: 5, kind: input, shape index: {}]
  %s6 = inlined_call_operand.vmem [shape: f32[1,16], index: 6, kind: input, shape index: {}]
  %s7 = inlined_call_operand.vmem [shape: f32[256,16], index: 7, kind: output, shape index: {}]
  %s8 = sld [smem:[#allocation0]]
  $region61: #{tpu_custom_call.1} parent=0
    _
  %s10 = ssub.s32 1, %s8
  %s11 = scalar_select 0, %s10, %s8
  loop: start=0, step=1, limit=4
  $region2: #{tpu_custom_call.1} parent=0 // loop_pre_header
    _
  $region3: #{tpu_custom_call.1} parent=0 // loop_header
    %s13 = sphi 0, %s17
    %p14 = scmp.ge.s32.totalorder %s13, 4
    %s23 = sphi 0, %s25
    %s26 = sphi 0, %s23
    %s27 = sphi 0, %s26
    %s43 = sphi 0, %s27
    %s47 = sphi 0, %s47
    %s49 = sphi 0, %s47
    %s50 = sphi 0, %s49
    %s64 = sphi 0, %s50
    %s68 = sphi 0, %s68
    %s70 = sphi 0, %s68
    %s71 = sphi 0, %s70
    %s85 = sphi 0, %s71
    %s89 = sphi 0, %s89
    %s91 = sphi 0, %s89
    %s92 = sphi 0, %s91
    %s106 = sphi 0, %s92
    %s110 = sphi 0, %s110
    %s112 = sphi 0, %s110
    %s113 = sphi 0, %s112
    %s127 = sphi 0, %s113
    %s131 = sphi 0, %s131
    %s133 = sphi 0, %s131
    %s134 = sphi 0, %s133
    %s148 = sphi 0, %s134
    %s152 = sphi 0, %s152
    %s154 = sphi 0, %s152
    %s155 = sphi 0, %s154
    %s169 = sphi 0, %s155
    %s175 = sphi 0, %s177
    %s178 = sphi 0, %s175
    %s179 = sphi 0, %s178
    %s195 = sphi 0, %s179
  $region4: #{tpu_custom_call.1} parent=0 // loop_header_branch
    %16 = sbr.rel (%p14) target = $region8
  $region5: #{tpu_custom_call.1} parent=0 // loop_body
    %s18 = ssub.s32 %s13, 1
    %s19 = ssub.s32 %s13, 2
    %s20 = sadd.s32 %s13, 1
    %s21 = ssub.s32 %s13, %s20
    %p22 = scmp.eq.s32.totalorder %s21, 0
    %s24 = sadd.s32 %s23, 1
    %s25 = scalar_select %p22, %s23, %s24
    %p28 = pneg %p22
    %p29 = scmp.eq.s32.totalorder %s13, 1
    %p30 = por %p28, %p29
    %p31 = scmp.ne.s32.totalorder %s23, %s26
    %p32 = scmp.eq.s32.totalorder %s13, 0
    %p33 = por %p31, %p32
    %p34 = scmp.ne.s32.totalorder %s23, %s26
    %p35 = scmp.eq.s32.totalorder %s18, 1
    %p36 = por %p34, %p35
    %p37 = scmp.ne.s32.totalorder %s26, %s27
    %p38 = scmp.eq.s32.totalorder %s18, 0
    %p39 = por %p37, %p38
    %p40 = scmp.ne.s32.totalorder %s26, %s27
    %p41 = scmp.eq.s32.totalorder %s19, 1
    %p42 = por %p40, %p41
    %p44 = scmp.ne.s32.totalorder %s27, %s43
    %p45 = scmp.eq.s32.totalorder %s19, 0
    %p46 = por %p44, %p45
    %s48 = sadd.s32 %s47, 1
    %p51 = scmp.eq.s32.totalorder %s13, 1
    %p52 = scmp.ne.s32.totalorder %s47, %s49
    %p53 = scmp.eq.s32.totalorder %s13, 0
    %p54 = por %p52, %p53
    %p55 = scmp.ne.s32.totalorder %s47, %s49
    %p56 = scmp.eq.s32.totalorder %s18, 1
    %p57 = por %p55, %p56
    %p58 = scmp.ne.s32.totalorder %s49, %s50
    %p59 = scmp.eq.s32.totalorder %s18, 0
    %p60 = por %p58, %p59
    %p61 = scmp.ne.s32.totalorder %s49, %s50
    %p62 = scmp.eq.s32.totalorder %s19, 1
    %p63 = por %p61, %p62
    %p65 = scmp.ne.s32.totalorder %s50, %s64
    %p66 = scmp.eq.s32.totalorder %s19, 0
    %p67 = por %p65, %p66
    %s69 = sadd.s32 %s68, 1
    %p72 = scmp.eq.s32.totalorder %s13, 1
    %p73 = scmp.ne.s32.totalorder %s68, %s70
    %p74 = scmp.eq.s32.totalorder %s13, 0
    %p75 = por %p73, %p74
    %p76 = scmp.ne.s32.totalorder %s68, %s70
    %p77 = scmp.eq.s32.totalorder %s18, 1
    %p78 = por %p76, %p77
    %p79 = scmp.ne.s32.totalorder %s70, %s71
    %p80 = scmp.eq.s32.totalorder %s18, 0
    %p81 = por %p79, %p80
    %p82 = scmp.ne.s32.totalorder %s70, %s71
    %p83 = scmp.eq.s32.totalorder %s19, 1
    %p84 = por %p82, %p83
    %p86 = scmp.ne.s32.totalorder %s71, %s85
    %p87 = scmp.eq.s32.totalorder %s19, 0
    %p88 = por %p86, %p87
    %s90 = sadd.s32 %s89, 1
    %p93 = scmp.eq.s32.totalorder %s13, 1
    %p94 = scmp.ne.s32.totalorder %s89, %s91
    %p95 = scmp.eq.s32.totalorder %s13, 0
    %p96 = por %p94, %p95
    %p97 = scmp.ne.s32.totalorder %s89, %s91
    %p98 = scmp.eq.s32.totalorder %s18, 1
    %p99 = por %p97, %p98
    %p100 = scmp.ne.s32.totalorder %s91, %s92
    %p101 = scmp.eq.s32.totalorder %s18, 0
    %p102 = por %p100, %p101
    %p103 = scmp.ne.s32.totalorder %s91, %s92
    %p104 = scmp.eq.s32.totalorder %s19, 1
    %p105 = por %p103, %p104
    %p107 = scmp.ne.s32.totalorder %s92, %s106
    %p108 = scmp.eq.s32.totalorder %s19, 0
    %p109 = por %p107, %p108
    %s111 = sadd.s32 %s110, 1
    %p114 = scmp.eq.s32.totalorder %s13, 1
    %p115 = scmp.ne.s32.totalorder %s110, %s112
    %p116 = scmp.eq.s32.totalorder %s13, 0
    %p117 = por %p115, %p116
    %p118 = scmp.ne.s32.totalorder %s110, %s112
    %p119 = scmp.eq.s32.totalorder %s18, 1
    %p120 = por %p118, %p119
    %p121 = scmp.ne.s32.totalorder %s112, %s113
    %p122 = scmp.eq.s32.totalorder %s18, 0
    %p123 = por %p121, %p122
    %p124 = scmp.ne.s32.totalorder %s112, %s113
    %p125 = scmp.eq.s32.totalorder %s19, 1
    %p126 = por %p124, %p125
    %p128 = scmp.ne.s32.totalorder %s113, %s127
    %p129 = scmp.eq.s32.totalorder %s19, 0
    %p130 = por %p128, %p129
    %s132 = sadd.s32 %s131, 1
    %p135 = scmp.eq.s32.totalorder %s13, 1
    %p136 = scmp.ne.s32.totalorder %s131, %s133
    %p137 = scmp.eq.s32.totalorder %s13, 0
    %p138 = por %p136, %p137
    %p139 = scmp.ne.s32.totalorder %s131, %s133
    %p140 = scmp.eq.s32.totalorder %s18, 1
    %p141 = por %p139, %p140
    %p142 = scmp.ne.s32.totalorder %s133, %s134
    %p143 = scmp.eq.s32.totalorder %s18, 0
    %p144 = por %p142, %p143
    %p145 = scmp.ne.s32.totalorder %s133, %s134
    %p146 = scmp.eq.s32.totalorder %s19, 1
    %p147 = por %p145, %p146
    %p149 = scmp.ne.s32.totalorder %s134, %s148
    %p150 = scmp.eq.s32.totalorder %s19, 0
    %p151 = por %p149, %p150
    %s153 = sadd.s32 %s152, 1
    %p156 = scmp.eq.s32.totalorder %s13, 1
    %p157 = scmp.ne.s32.totalorder %s152, %s154
    %p158 = scmp.eq.s32.totalorder %s13, 0
    %p159 = por %p157, %p158
    %p160 = scmp.ne.s32.totalorder %s152, %s154
    %p161 = scmp.eq.s32.totalorder %s18, 1
    %p162 = por %p160, %p161
    %p163 = scmp.ne.s32.totalorder %s154, %s155
    %p164 = scmp.eq.s32.totalorder %s18, 0
    %p165 = por %p163, %p164
    %p166 = scmp.ne.s32.totalorder %s154, %s155
    %p167 = scmp.eq.s32.totalorder %s19, 1
    %p168 = por %p166, %p167
    %p170 = scmp.ne.s32.totalorder %s155, %s169
    %p171 = scmp.eq.s32.totalorder %s19, 0
    %p172 = por %p170, %p171
    %s173 = ssub.s32 %s13, %s20
    %p174 = scmp.eq.s32.totalorder %s173, 0
    %s176 = sadd.s32 %s175, 1
    %s177 = scalar_select %p174, %s175, %s176
    %p180 = pneg %p174
    %p181 = scmp.eq.s32.totalorder %s13, 1
    %p182 = por %p180, %p181
    %p183 = scmp.ne.s32.totalorder %s175, %s178
    %p184 = scmp.eq.s32.totalorder %s13, 0
    %p185 = por %p183, %p184
    %p186 = scmp.ne.s32.totalorder %s175, %s178
    %p187 = scmp.eq.s32.totalorder %s18, 1
    %p188 = por %p186, %p187
    %p189 = scmp.ne.s32.totalorder %s178, %s179
    %p190 = scmp.eq.s32.totalorder %s18, 0
    %p191 = por %p189, %p190
    %p192 = scmp.ne.s32.totalorder %s178, %s179
    %p193 = scmp.eq.s32.totalorder %s19, 1
    %p194 = por %p192, %p193
    %p196 = scmp.ne.s32.totalorder %s179, %s195
    %p197 = scmp.eq.s32.totalorder %s19, 0
    %p198 = por %p196, %p197
    %p199 = scmp.le.s32.totalorder 1, %s13
    %p200 = scmp.lt.s32.totalorder %s13, 3
    %p201 = pnand %p199, %p200
    %p202 = pneg %p201
    // Predicated region
    $region9: #{tpu_custom_call.1} parent=5 // pred_check
      _
    $region10: #{tpu_custom_call.1} parent=5 // pred_check_branch
      %204 = sbr.rel (%p201) target = $region12
    $region11: #{tpu_custom_call.1} parent=5 // pred_region
      %s205 = ssub.s32 %s13, 1
      // Predicated region
      $region13: #{tpu_custom_call.1} parent=11 // pred_check
        %p206 = pneg %p60
      $region14: #{tpu_custom_call.1} parent=11 // pred_check_branch
        %208 = sbr.rel (%p206) target = $region16
      $region15: #{tpu_custom_call.1} parent=11 // pred_region
        _
      $region16: #{tpu_custom_call.1} parent=11 // pred_fallthru
        _
      // Predicated region
      $region17: #{tpu_custom_call.1} parent=11 // pred_check
        %p209 = pneg %p81
      $region18: #{tpu_custom_call.1} parent=11 // pred_check_branch
        %211 = sbr.rel (%p209) target = $region20
      $region19: #{tpu_custom_call.1} parent=11 // pred_region
        _
      $region20: #{tpu_custom_call.1} parent=11 // pred_fallthru
        _
      // Predicated region
      $region21: #{tpu_custom_call.1} parent=11 // pred_check
        %p212 = pneg %p102
      $region22: #{tpu_custom_call.1} parent=11 // pred_check_branch
        %214 = sbr.rel (%p212) target = $region24
      $region23: #{tpu_custom_call.1} parent=11 // pred_region
        _
      $region24: #{tpu_custom_call.1} parent=11 // pred_fallthru
        _
      // Predicated region
      $region25: #{tpu_custom_call.1} parent=11 // pred_check
        %p215 = pneg %p123
      $region26: #{tpu_custom_call.1} parent=11 // pred_check_branch
        %217 = sbr.rel (%p215) target = $region28
      $region27: #{tpu_custom_call.1} parent=11 // pred_region
        _
      $region28: #{tpu_custom_call.1} parent=11 // pred_fallthru
        _
      // Predicated region
      $region29: #{tpu_custom_call.1} parent=11 // pred_check
        %p218 = pneg %p144
      $region30: #{tpu_custom_call.1} parent=11 // pred_check_branch
        %220 = sbr.rel (%p218) target = $region32
      $region31: #{tpu_custom_call.1} parent=11 // pred_region
        _
      $region32: #{tpu_custom_call.1} parent=11 // pred_fallthru
        _
      // Predicated region
      $region33: #{tpu_custom_call.1} parent=11 // pred_check
        %p221 = pneg %p165
      $region34: #{tpu_custom_call.1} parent=11 // pred_check_branch
        %223 = sbr.rel (%p221) target = $region36
      $region35: #{tpu_custom_call.1} parent=11 // pred_region
        _
      $region36: #{tpu_custom_call.1} parent=11 // pred_fallthru
        _
    $region12: #{tpu_custom_call.1} parent=5 // pred_fallthru
      _
    %p224 = scmp.lt.s32.totalorder %s13, 2
    // Predicated region
    $region37: #{tpu_custom_call.1} parent=5 // pred_check
      %p225 = pneg %p224
    $region38: #{tpu_custom_call.1} parent=5 // pred_check_branch
      %227 = sbr.rel (%p225) target = $region40
    $region39: #{tpu_custom_call.1} parent=5 // pred_region
      // Predicated region
      $region41: #{tpu_custom_call.1} parent=39 // pred_check
        %p228 = pneg %p33
      $region42: #{tpu_custom_call.1} parent=39 // pred_check_branch
        %230 = sbr.rel (%p228) target = $region44
      $region43: #{tpu_custom_call.1} parent=39 // pred_region
        %s231 = smul.u32 16, %s13
        %p232 = scmp.lt.s32.totalorder %s231, 31
        %s233 = scalar_select %p232, %s231, 31
        %s234 = smul.addr %s233, 4
        %s235 = scalar_lea.vmem %s0, %s234
        %s236 = smul.u32 16, %s13
      $region44: #{tpu_custom_call.1} parent=39 // pred_fallthru
        _
    $region40: #{tpu_custom_call.1} parent=5 // pred_fallthru
      _
    %p237 = scmp.le.s32.totalorder 1, %s13
    %p238 = scmp.lt.s32.totalorder %s13, 3
    %p239 = pnand %p237, %p238
    %p240 = pneg %p239
    // Predicated region
    $region45: #{tpu_custom_call.1} parent=5 // pred_check
      _
    $region46: #{tpu_custom_call.1} parent=5 // pred_check_branch
      %242 = sbr.rel (%p239) target = $region48
    $region47: #{tpu_custom_call.1} parent=5 // pred_region
      %s243 = ssub.s32 %s13, 1
      %s244 = smul.u32 16, %s18
      %p245 = scmp.lt.s32.totalorder %s244, 31
      %s246 = scalar_select %p245, %s244, 31
      %s247 = smul.addr %s246, 4
      %s248 = scalar_lea.vmem %s0, %s247
      %p249 = pneg %p39
      %p250 = pneg %p36
      %p251 = pneg %p60
      %p252 = pneg %p57
      %p253 = pneg %p81
      %p254 = pneg %p78
      %p255 = pneg %p102
      %p256 = pneg %p99
      %p257 = pneg %p123
      %p258 = pneg %p120
      %p259 = pneg %p144
      %p260 = pneg %p141
      %p261 = pneg %p165
      %p262 = pneg %p162
      %p263 = pneg %p191
      %p264 = pneg %p188
      %s265 = smul.u32 16, %s18
      %p266 = scmp.lt.s32.totalorder %s265, 31
      %s267 = scalar_select %p266, %s265, 31
      %s268 = smul.addr %s267, 8
      %s269 = scalar_lea.vmem %s7, %s268
      %s270 = smul.u32 16, %s18
      %p271 = scmp.lt.s32.totalorder %s270, 31
      %s272 = scalar_select %p271, %s270, 31
      %s273 = smul.addr %s272, 4
      %s274 = scalar_lea.vmem %s0, %s273
      %s275 = smul.u32 16, %s18
      %s276 = smul.u32 16, %s18
      %p277 = scmp.lt.s32.totalorder %s276, 31
      %s278 = scalar_select %p277, %s276, 31
      %s279 = smul.addr %s278, 8
      %s280 = scalar_lea.vmem %s7, %s279
      %s281 = smul.u32 16, %s18
      %v283 = vld [vmem:[%s274] sm:$0xf]
      %v284 = vld [vmem:[%s274 + $0x4] sm:$0xf]
      %v285 = vld [vmem:[%s274 + $0x8] sm:$0xf]
      %v286 = vld [vmem:[%s274 + $0xc] sm:$0xf]
      %v287 = vld [vmem:[%s274 + $0x10] sm:$0xf]
      %v288 = vld [vmem:[%s274 + $0x14] sm:$0xf]
      %v289 = vld [vmem:[%s274 + $0x18] sm:$0xf]
      %v290 = vld [vmem:[%s274 + $0x1c] sm:$0xf]
      %v291 = vld [vmem:[%s274 + $0x20] sm:$0xf]
      %v292 = vld [vmem:[%s274 + $0x24] sm:$0xf]
      %v293 = vld [vmem:[%s274 + $0x28] sm:$0xf]
      %v294 = vld [vmem:[%s274 + $0x2c] sm:$0xf]
      %v295 = vld [vmem:[%s274 + $0x30] sm:$0xf]
      %v296 = vld [vmem:[%s274 + $0x34] sm:$0xf]
      %v297 = vld [vmem:[%s274 + $0x38] sm:$0xf]
      %v298 = vld [vmem:[%s274 + $0x3c] sm:$0xf]
      %v299 = vld [vmem:[%s1] sm:$0xf]
      %v300 = vld [vmem:[%s1 + $0x4] sm:$0xf]
      %v301 = vld [vmem:[%s1 + $0x8] sm:$0xf]
      %v302 = vld [vmem:[%s1 + $0xc] sm:$0xf]
      %v303 = vld [vmem:[%s2] sm:$0x1]
      %v305 = vlaneseq
      %v306 = vshrl.u32 %v305, 7
      %v307 = vsub.s32 0, %v306
      %v308 = vrot.slane %v303, %v307
      %v326 = vunpack.c.l.b16 %v283
      %v327 = vunpack.c.l.b16 %v284
      %v328 = vunpack.c.l.b16 %v285
      %v329 = vunpack.c.l.b16 %v286
      %v330 = vunpack.c.l.b16 %v287
      %v331 = vunpack.c.l.b16 %v288
      %v332 = vunpack.c.l.b16 %v289
      %v333 = vunpack.c.l.b16 %v290
      %v334 = vunpack.c.l.b16 %v291
      %v335 = vunpack.c.l.b16 %v292
      %v336 = vunpack.c.l.b16 %v293
      %v337 = vunpack.c.l.b16 %v294
      %v338 = vunpack.c.l.b16 %v295
      %v339 = vunpack.c.l.b16 %v296
      %v340 = vunpack.c.l.b16 %v297
      %v341 = vunpack.c.l.b16 %v298
      %v342 = vpack.c.b16 %v327, %v326
      %v343 = vpack.c.b16 %v329, %v328
      %v344 = vpack.c.b16 %v331, %v330
      %v345 = vpack.c.b16 %v333, %v332
      %v346 = vpack.c.b16 %v335, %v334
      %v347 = vpack.c.b16 %v337, %v336
      %v348 = vpack.c.b16 %v339, %v338
      %v349 = vpack.c.b16 %v341, %v340
      %v354 = vunpack.c.l.b16 %v299
      %v355 = vunpack.c.l.b16 %v300
      %v356 = vunpack.c.l.b16 %v301
      %v357 = vunpack.c.l.b16 %v302
      %v358 = vpack.c.b16 %v355, %v354
      %v359 = vpack.c.b16 %v357, %v356
      %vm362 = vcmask 261120
      %v364 = vsel %vm362, %v342, 0
      %v367 = vsel %vm362, %v343, 0
      %v370 = vsel %vm362, %v344, 0
      %v373 = vsel %vm362, %v345, 0
      %v376 = vsel %vm362, %v346, 0
      %v379 = vsel %vm362, %v347, 0
      %v382 = vsel %vm362, %v348, 0
      %v385 = vsel %vm362, %v349, 0
      %387 = vmatprep.subr.bf16.mxu0 0
      %388 = vmatpush1.bf16.msra.mxu0 %v358
      %389 = vmatprep.subr.bf16.mxu0 0
      %390 = vmatpush1.bf16.msra.mxu0 %v359
      %391 = vmatprep.subr.bf16.mxu0 0
      %392 = vmatpush1.bf16.msra.mxu0 0
      %393 = vmatprep.subr.bf16.mxu0 0
      %394 = vmatpush1.bf16.msra.mxu0 0
      %395 = vmatprep.subr.bf16.mxu0 0
      %396 = vmatpush1.bf16.msra.mxu0 0
      %397 = vmatprep.subr.bf16.mxu0 0
      %398 = vmatpush1.bf16.msra.mxu0 0
      %399 = vmatprep.subr.bf16.mxu0 0
      %400 = vmatpush1.bf16.msra.mxu0 0
      %401 = vmatprep.subr.bf16.mxu0 0
      %402 = vmatpush1.bf16.msra.mxu0 0
      %403 = vmatprep.subr.bf16.mxu0 0
      %404 = vmatpush1.bf16.msra.mxu0 0
      %405 = vmatprep.subr.bf16.mxu0 0
      %406 = vmatpush1.bf16.msra.mxu0 0
      %407 = vmatprep.subr.bf16.mxu0 0
      %408 = vmatpush1.bf16.msra.mxu0 0
      %409 = vmatprep.subr.bf16.mxu0 0
      %410 = vmatpush1.bf16.msra.mxu0 0
      %411 = vmatprep.subr.bf16.mxu0 0
      %412 = vmatpush1.bf16.msra.mxu0 0
      %413 = vmatprep.subr.bf16.mxu0 0
      %414 = vmatpush1.bf16.msra.mxu0 0
      %415 = vmatprep.subr.bf16.mxu0 0
      %416 = vmatpush1.bf16.msra.mxu0 0
      %417 = vmatprep.subr.bf16.mxu0 0
      %418 = vmatpush1.bf16.msra.mxu0 0
      %419 = vmatprep.mubr.bf16.mxu0 0
      %420 = vmatmul.mubr.bf16.gmra.mrb[0].mxu0 %v364
      %v421 = vpop.f32.mrb[0].mxu0
      %v422 = vadd.f32 %v308, %v421
      %v423 = vpop.f32.mrb[0].mxu0
      %v424 = vpop.f32.mrb[0].mxu0
      %v425 = vadd.f32 %v308, %v424
      %v426 = vpop.f32.mrb[0].mxu0
      %427 = vmatprep.mubr.bf16.mxu0 0
      %428 = vmatmul.mubr.bf16.gmra.mrb[0].mxu0 %v367
      %v429 = vpop.f32.mrb[0].mxu0
      %v430 = vadd.f32 %v308, %v429
      %v431 = vpop.f32.mrb[0].mxu0
      %v432 = vpop.f32.mrb[0].mxu0
      %v433 = vadd.f32 %v308, %v432
      %v434 = vpop.f32.mrb[0].mxu0
      %435 = vmatprep.mubr.bf16.mxu0 0
      %436 = vmatmul.mubr.bf16.gmra.mrb[0].mxu0 %v370
      %v437 = vpop.f32.mrb[0].mxu0
      %v438 = vadd.f32 %v308, %v437
      %v439 = vpop.f32.mrb[0].mxu0
      %v440 = vpop.f32.mrb[0].mxu0
      %v441 = vadd.f32 %v308, %v440
      %v442 = vpop.f32.mrb[0].mxu0
      %443 = vmatprep.mubr.bf16.mxu0 0
      %444 = vmatmul.mubr.bf16.gmra.mrb[0].mxu0 %v373
      %v445 = vpop.f32.mrb[0].mxu0
      %v446 = vadd.f32 %v308, %v445
      %v447 = vpop.f32.mrb[0].mxu0
      %v448 = vpop.f32.mrb[0].mxu0
      %v449 = vadd.f32 %v308, %v448
      %v450 = vpop.f32.mrb[0].mxu0
      %451 = vmatprep.mubr.bf16.mxu0 0
      %452 = vmatmul.mubr.bf16.gmra.mrb[0].mxu0 %v376
      %v453 = vpop.f32.mrb[0].mxu0
      %v454 = vadd.f32 %v308, %v453
      %v455 = vpop.f32.mrb[0].mxu0
      %v456 = vpop.f32.mrb[0].mxu0
      %v457 = vadd.f32 %v308, %v456
      %v458 = vpop.f32.mrb[0].mxu0
      %459 = vmatprep.mubr.bf16.mxu0 0
      %460 = vmatmul.mubr.bf16.gmra.mrb[0].mxu0 %v379
      %v461 = vpop.f32.mrb[0].mxu0
      %v462 = vadd.f32 %v308, %v461
      %v463 = vpop.f32.mrb[0].mxu0
      %v464 = vpop.f32.mrb[0].mxu0
      %v465 = vadd.f32 %v308, %v464
      %v466 = vpop.f32.mrb[0].mxu0
      %467 = vmatprep.mubr.bf16.mxu0 0
      %468 = vmatmul.mubr.bf16.gmra.mrb[0].mxu0 %v382
      %v469 = vpop.f32.mrb[0].mxu0
      %v470 = vadd.f32 %v308, %v469
      %v471 = vpop.f32.mrb[0].mxu0
      %v472 = vpop.f32.mrb[0].mxu0
      %v473 = vadd.f32 %v308, %v472
      %v474 = vpop.f32.mrb[0].mxu0
      %475 = vmatprep.mubr.bf16.mxu0 0
      %476 = vmatmul.mubr.bf16.gmra.mrb[0].mxu0 %v385
      %v477 = vpop.f32.mrb[0].mxu0
      %v478 = vadd.f32 %v308, %v477
      %v479 = vpop.f32.mrb[0].mxu0
      %v480 = vpop.f32.mrb[0].mxu0
      %v481 = vadd.f32 %v308, %v480
      %v482 = vpop.f32.mrb[0].mxu0
      %483 = vdwg.mxu0
      %v484 = vmax.f32 %v422, 0.0
      %v485 = vmax.f32 %v425, 0.0
      %v486 = vmax.f32 %v430, 0.0
      %v487 = vmax.f32 %v433, 0.0
      %v488 = vmax.f32 %v438, 0.0
      %v489 = vmax.f32 %v441, 0.0
      %v490 = vmax.f32 %v446, 0.0
      %v491 = vmax.f32 %v449, 0.0
      %v492 = vmax.f32 %v454, 0.0
      %v493 = vmax.f32 %v457, 0.0
      %v494 = vmax.f32 %v462, 0.0
      %v495 = vmax.f32 %v465, 0.0
      %v496 = vmax.f32 %v470, 0.0
      %v497 = vmax.f32 %v473, 0.0
      %v498 = vmax.f32 %v478, 0.0
      %v499 = vmax.f32 %v481, 0.0
      %v500 = vpack.c.bf16 %v485, %v484
      %v501 = vpack.c.bf16 %v487, %v486
      %v502 = vpack.c.bf16 %v489, %v488
      %v503 = vpack.c.bf16 %v491, %v490
      %v504 = vpack.c.bf16 %v493, %v492
      %v505 = vpack.c.bf16 %v495, %v494
      %v506 = vpack.c.bf16 %v497, %v496
      %v507 = vpack.c.bf16 %v499, %v498
      %v508 = vld [vmem:[%s3] sm:$0xf]
      %v509 = vld [vmem:[%s3 + $0x4] sm:$0xf]
      %v510 = vld [vmem:[%s3 + $0x8] sm:$0xf]
      %v511 = vld [vmem:[%s3 + $0xc] sm:$0xf]
      %v512 = vld [vmem:[%s3 + $0x10] sm:$0xf]
      %v513 = vld [vmem:[%s3 + $0x14] sm:$0xf]
      %v514 = vld [vmem:[%s3 + $0x18] sm:$0xf]
      %v515 = vld [vmem:[%s3 + $0x1c] sm:$0xf]
      %v516 = vld [vmem:[%s4] sm:$0x1]
      %v518 = vlaneseq
      %v519 = vshrl.u32 %v518, 7
      %v520 = vsub.s32 0, %v519
      %v521 = vrot.slane %v516, %v520
      %v531 = vunpack.c.l.b16 %v508
      %v532 = vunpack.c.l.b16 %v509
      %v533 = vunpack.c.l.b16 %v510
      %v534 = vunpack.c.l.b16 %v511
      %v535 = vunpack.c.l.b16 %v512
      %v536 = vunpack.c.l.b16 %v513
      %v537 = vunpack.c.l.b16 %v514
      %v538 = vunpack.c.l.b16 %v515
      %v539 = vpack.c.b16 %v532, %v531
      %v540 = vpack.c.b16 %v534, %v533
      %v541 = vpack.c.b16 %v536, %v535
      %v542 = vpack.c.b16 %v538, %v537
      %vm547 = vcmask 523264
      %v549 = vsel %vm547, %v500, 0
      %v552 = vsel %vm547, %v501, 0
      %v555 = vsel %vm547, %v502, 0
      %v558 = vsel %vm547, %v503, 0
      %v561 = vsel %vm547, %v504, 0
      %v564 = vsel %vm547, %v505, 0
      %v567 = vsel %vm547, %v506, 0
      %v570 = vsel %vm547, %v507, 0
      %572 = vmatprep.subr.bf16.mxu0 0
      %573 = vmatpush1.bf16.msra.mxu0 %v539
      %574 = vmatprep.subr.bf16.mxu0 0
      %575 = vmatpush1.bf16.msra.mxu0 %v540
      %576 = vmatprep.subr.bf16.mxu0 0
      %577 = vmatpush1.bf16.msra.mxu0 %v541
      %578 = vmatprep.subr.bf16.mxu0 0
      %579 = vmatpush1.bf16.msra.mxu0 %v542
      %580 = vmatprep.subr.bf16.mxu0 0
      %581 = vmatpush1.bf16.msra.mxu0 0
      %582 = vmatprep.subr.bf16.mxu0 0
      %583 = vmatpush1.bf16.msra.mxu0 0
      %584 = vmatprep.subr.bf16.mxu0 0
      %585 = vmatpush1.bf16.msra.mxu0 0
      %586 = vmatprep.subr.bf16.mxu0 0
      %587 = vmatpush1.bf16.msra.mxu0 0
      %588 = vmatprep.subr.bf16.mxu0 0
      %589 = vmatpush1.bf16.msra.mxu0 0
      %590 = vmatprep.subr.bf16.mxu0 0
      %591 = vmatpush1.bf16.msra.mxu0 0
      %592 = vmatprep.subr.bf16.mxu0 0
      %593 = vmatpush1.bf16.msra.mxu0 0
      %594 = vmatprep.subr.bf16.mxu0 0
      %595 = vmatpush1.bf16.msra.mxu0 0
      %596 = vmatprep.subr.bf16.mxu0 0
      %597 = vmatpush1.bf16.msra.mxu0 0
      %598 = vmatprep.subr.bf16.mxu0 0
      %599 = vmatpush1.bf16.msra.mxu0 0
      %600 = vmatprep.subr.bf16.mxu0 0
      %601 = vmatpush1.bf16.msra.mxu0 0
      %602 = vmatprep.subr.bf16.mxu0 0
      %603 = vmatpush1.bf16.msra.mxu0 0
      %604 = vmatprep.mubr.bf16.mxu0 0
      %605 = vmatmul.mubr.bf16.gmra.mrb[0].mxu0 %v549
      %v606 = vpop.f32.mrb[0].mxu0
      %v607 = vadd.f32 %v521, %v606
      %v608 = vpop.f32.mrb[0].mxu0
      %v609 = vpop.f32.mrb[0].mxu0
      %v610 = vadd.f32 %v521, %v609
      %v611 = vpop.f32.mrb[0].mxu0
      %612 = vmatprep.mubr.bf16.mxu0 0
      %613 = vmatmul.mubr.bf16.gmra.mrb[0].mxu0 %v552
      %v614 = vpop.f32.mrb[0].mxu0
      %v615 = vadd.f32 %v521, %v614
      %v616 = vpop.f32.mrb[0].mxu0
      %v617 = vpop.f32.mrb[0].mxu0
      %v618 = vadd.f32 %v521, %v617
      %v619 = vpop.f32.mrb[0].mxu0
      %620 = vmatprep.mubr.bf16.mxu0 0
      %621 = vmatmul.mubr.bf16.gmra.mrb[0].mxu0 %v555
      %v622 = vpop.f32.mrb[0].mxu0
      %v623 = vadd.f32 %v521, %v622
      %v624 = vpop.f32.mrb[0].mxu0
      %v625 = vpop.f32.mrb[0].mxu0
      %v626 = vadd.f32 %v521, %v625
      %v627 = vpop.f32.mrb[0].mxu0
      %628 = vmatprep.mubr.bf16.mxu0 0
      %629 = vmatmul.mubr.bf16.gmra.mrb[0].mxu0 %v558
      %v630 = vpop.f32.mrb[0].mxu0
      %v631 = vadd.f32 %v521, %v630
      %v632 = vpop.f32.mrb[0].mxu0
      %v633 = vpop.f32.mrb[0].mxu0
      %v634 = vadd.f32 %v521, %v633
      %v635 = vpop.f32.mrb[0].mxu0
      %636 = vmatprep.mubr.bf16.mxu0 0
      %637 = vmatmul.mubr.bf16.gmra.mrb[0].mxu0 %v561
      %v638 = vpop.f32.mrb[0].mxu0
      %v639 = vadd.f32 %v521, %v638
      %v640 = vpop.f32.mrb[0].mxu0
      %v641 = vpop.f32.mrb[0].mxu0
      %v642 = vadd.f32 %v521, %v641
      %v643 = vpop.f32.mrb[0].mxu0
      %644 = vmatprep.mubr.bf16.mxu0 0
      %645 = vmatmul.mubr.bf16.gmra.mrb[0].mxu0 %v564
      %v646 = vpop.f32.mrb[0].mxu0
      %v647 = vadd.f32 %v521, %v646
      %v648 = vpop.f32.mrb[0].mxu0
      %v649 = vpop.f32.mrb[0].mxu0
      %v650 = vadd.f32 %v521, %v649
      %v651 = vpop.f32.mrb[0].mxu0
      %652 = vmatprep.mubr.bf16.mxu0 0
      %653 = vmatmul.mubr.bf16.gmra.mrb[0].mxu0 %v567
      %v654 = vpop.f32.mrb[0].mxu0
      %v655 = vadd.f32 %v521, %v654
      %v656 = vpop.f32.mrb[0].mxu0
      %v657 = vpop.f32.mrb[0].mxu0
      %v658 = vadd.f32 %v521, %v657
      %v659 = vpop.f32.mrb[0].mxu0
      %660 = vmatprep.mubr.bf16.mxu0 0
      %661 = vmatmul.mubr.bf16.gmra.mrb[0].mxu0 %v570
      %v662 = vpop.f32.mrb[0].mxu0
      %v663 = vadd.f32 %v521, %v662
      %v664 = vpop.f32.mrb[0].mxu0
      %v665 = vpop.f32.mrb[0].mxu0
      %v666 = vadd.f32 %v521, %v665
      %v667 = vpop.f32.mrb[0].mxu0
      %668 = vdwg.mxu0
      %v669 = vmax.f32 %v607, 0.0
      %v670 = vmax.f32 %v610, 0.0
      %v671 = vmax.f32 %v615, 0.0
      %v672 = vmax.f32 %v618, 0.0
      %v673 = vmax.f32 %v623, 0.0
      %v674 = vmax.f32 %v626, 0.0
      %v675 = vmax.f32 %v631, 0.0
      %v676 = vmax.f32 %v634, 0.0
      %v677 = vmax.f32 %v639, 0.0
      %v678 = vmax.f32 %v642, 0.0
      %v679 = vmax.f32 %v647, 0.0
      %v680 = vmax.f32 %v650, 0.0
      %v681 = vmax.f32 %v655, 0.0
      %v682 = vmax.f32 %v658, 0.0
      %v683 = vmax.f32 %v663, 0.0
      %v684 = vmax.f32 %v666, 0.0
      %v685 = vpack.c.bf16 %v670, %v669
      %v686 = vpack.c.bf16 %v672, %v671
      %v687 = vpack.c.bf16 %v674, %v673
      %v688 = vpack.c.bf16 %v676, %v675
      %v689 = vpack.c.bf16 %v678, %v677
      %v690 = vpack.c.bf16 %v680, %v679
      %v691 = vpack.c.bf16 %v682, %v681
      %v692 = vpack.c.bf16 %v684, %v683
      %v693 = vld [vmem:[%s5] sm:$0xf]
      %v694 = vld [vmem:[%s5 + $0x4] sm:$0xf]
      %v695 = vld [vmem:[%s5 + $0x8] sm:$0xf]
      %v696 = vld [vmem:[%s5 + $0xc] sm:$0xf]
      %v697 = vld [vmem:[%s5 + $0x10] sm:$0xf]
      %v698 = vld [vmem:[%s5 + $0x14] sm:$0xf]
      %v699 = vld [vmem:[%s5 + $0x18] sm:$0xf]
      %v700 = vld [vmem:[%s5 + $0x1c] sm:$0xf]
      %v701 = vld [vmem:[%s6] sm:$0x1]
      %v703 = vlaneseq
      %v704 = vshrl.u32 %v703, 7
      %v705 = vsub.s32 0, %v704
      %v706 = vrot.slane %v701, %v705
      %v716 = vunpack.c.l.b16 %v693
      %v717 = vunpack.c.l.b16 %v694
      %v718 = vunpack.c.l.b16 %v695
      %v719 = vunpack.c.l.b16 %v696
      %v720 = vunpack.c.l.b16 %v697
      %v721 = vunpack.c.l.b16 %v698
      %v722 = vunpack.c.l.b16 %v699
      %v723 = vunpack.c.l.b16 %v700
      %v724 = vpack.c.b16 %v717, %v716
      %v725 = vpack.c.b16 %v719, %v718
      %v726 = vpack.c.b16 %v721, %v720
      %v727 = vpack.c.b16 %v723, %v722
      %v733 = vsel %vm547, %v685, 0
      %v736 = vsel %vm547, %v686, 0
      %v739 = vsel %vm547, %v687, 0
      %v742 = vsel %vm547, %v688, 0
      %v745 = vsel %vm547, %v689, 0
      %v748 = vsel %vm547, %v690, 0
      %v751 = vsel %vm547, %v691, 0
      %v754 = vsel %vm547, %v692, 0
      %756 = vmatprep.subr.bf16.mxu0 0
      %757 = vmatpush1.bf16.msra.mxu0 %v724
      %758 = vmatprep.subr.bf16.mxu0 0
      %759 = vmatpush1.bf16.msra.mxu0 %v725
      %760 = vmatprep.subr.bf16.mxu0 0
      %761 = vmatpush1.bf16.msra.mxu0 %v726
      %762 = vmatprep.subr.bf16.mxu0 0
      %763 = vmatpush1.bf16.msra.mxu0 %v727
      %764 = vmatprep.subr.bf16.mxu0 0
      %765 = vmatpush1.bf16.msra.mxu0 0
      %766 = vmatprep.subr.bf16.mxu0 0
      %767 = vmatpush1.bf16.msra.mxu0 0
      %768 = vmatprep.subr.bf16.mxu0 0
      %769 = vmatpush1.bf16.msra.mxu0 0
      %770 = vmatprep.subr.bf16.mxu0 0
      %771 = vmatpush1.bf16.msra.mxu0 0
      %772 = vmatprep.subr.bf16.mxu0 0
      %773 = vmatpush1.bf16.msra.mxu0 0
      %774 = vmatprep.subr.bf16.mxu0 0
      %775 = vmatpush1.bf16.msra.mxu0 0
      %776 = vmatprep.subr.bf16.mxu0 0
      %777 = vmatpush1.bf16.msra.mxu0 0
      %778 = vmatprep.subr.bf16.mxu0 0
      %779 = vmatpush1.bf16.msra.mxu0 0
      %780 = vmatprep.subr.bf16.mxu0 0
      %781 = vmatpush1.bf16.msra.mxu0 0
      %782 = vmatprep.subr.bf16.mxu0 0
      %783 = vmatpush1.bf16.msra.mxu0 0
      %784 = vmatprep.subr.bf16.mxu0 0
      %785 = vmatpush1.bf16.msra.mxu0 0
      %786 = vmatprep.subr.bf16.mxu0 0
      %787 = vmatpush1.bf16.msra.mxu0 0
      %788 = vmatprep.mubr.bf16.mxu0 0
      %789 = vmatmul.mubr.bf16.gmra.mrb[0].mxu0 %v733
      %v790 = vpop.f32.mrb[0].mxu0
      %v791 = vadd.f32 %v706, %v790
      %v792 = vpop.f32.mrb[0].mxu0
      %v793 = vpop.f32.mrb[0].mxu0
      %v794 = vadd.f32 %v706, %v793
      %v795 = vpop.f32.mrb[0].mxu0
      %796 = vmatprep.mubr.bf16.mxu0 0
      %797 = vmatmul.mubr.bf16.gmra.mrb[0].mxu0 %v736
      %v798 = vpop.f32.mrb[0].mxu0
      %v799 = vadd.f32 %v706, %v798
      %v800 = vpop.f32.mrb[0].mxu0
      %v801 = vpop.f32.mrb[0].mxu0
      %v802 = vadd.f32 %v706, %v801
      %v803 = vpop.f32.mrb[0].mxu0
      %804 = vmatprep.mubr.bf16.mxu0 0
      %805 = vmatmul.mubr.bf16.gmra.mrb[0].mxu0 %v739
      %v806 = vpop.f32.mrb[0].mxu0
      %v807 = vadd.f32 %v706, %v806
      %v808 = vpop.f32.mrb[0].mxu0
      %v809 = vpop.f32.mrb[0].mxu0
      %v810 = vadd.f32 %v706, %v809
      %v811 = vpop.f32.mrb[0].mxu0
      %812 = vmatprep.mubr.bf16.mxu0 0
      %813 = vmatmul.mubr.bf16.gmra.mrb[0].mxu0 %v742
      %v814 = vpop.f32.mrb[0].mxu0
      %v815 = vadd.f32 %v706, %v814
      %v816 = vpop.f32.mrb[0].mxu0
      %v817 = vpop.f32.mrb[0].mxu0
      %v818 = vadd.f32 %v706, %v817
      %v819 = vpop.f32.mrb[0].mxu0
      %820 = vmatprep.mubr.bf16.mxu0 0
      %821 = vmatmul.mubr.bf16.gmra.mrb[0].mxu0 %v745
      %v822 = vpop.f32.mrb[0].mxu0
      %v823 = vadd.f32 %v706, %v822
      %v824 = vpop.f32.mrb[0].mxu0
      %v825 = vpop.f32.mrb[0].mxu0
      %v826 = vadd.f32 %v706, %v825
      %v827 = vpop.f32.mrb[0].mxu0
      %828 = vmatprep.mubr.bf16.mxu0 0
      %829 = vmatmul.mubr.bf16.gmra.mrb[0].mxu0 %v748
      %v830 = vpop.f32.mrb[0].mxu0
      %v831 = vadd.f32 %v706, %v830
      %v832 = vpop.f32.mrb[0].mxu0
      %v833 = vpop.f32.mrb[0].mxu0
      %v834 = vadd.f32 %v706, %v833
      %v835 = vpop.f32.mrb[0].mxu0
      %836 = vmatprep.mubr.bf16.mxu0 0
      %837 = vmatmul.mubr.bf16.gmra.mrb[0].mxu0 %v751
      %v838 = vpop.f32.mrb[0].mxu0
      %v839 = vadd.f32 %v706, %v838
      %v840 = vpop.f32.mrb[0].mxu0
      %v841 = vpop.f32.mrb[0].mxu0
      %v842 = vadd.f32 %v706, %v841
      %v843 = vpop.f32.mrb[0].mxu0
      %844 = vmatprep.mubr.bf16.mxu0 0
      %845 = vmatmul.mubr.bf16.gmra.mrb[0].mxu0 %v754
      %v846 = vpop.f32.mrb[0].mxu0
      %v847 = vadd.f32 %v706, %v846
      %v848 = vpop.f32.mrb[0].mxu0
      %v849 = vpop.f32.mrb[0].mxu0
      %v850 = vadd.f32 %v706, %v849
      %v851 = vpop.f32.mrb[0].mxu0
      %852 = vdwg.mxu0
      %vm853 = vcmask 130048
      %854 = vst.msk [vmem:[%s280] sm:$0xff] %vm853, %v791
      %855 = vst.msk [vmem:[%s280 + $0x8] sm:$0xff] %vm853, %v794
      %856 = vst.msk [vmem:[%s280 + $0x10] sm:$0xff] %vm853, %v799
      %857 = vst.msk [vmem:[%s280 + $0x18] sm:$0xff] %vm853, %v802
      %858 = vst.msk [vmem:[%s280 + $0x20] sm:$0xff] %vm853, %v807
      %859 = vst.msk [vmem:[%s280 + $0x28] sm:$0xff] %vm853, %v810
      %860 = vst.msk [vmem:[%s280 + $0x30] sm:$0xff] %vm853, %v815
      %861 = vst.msk [vmem:[%s280 + $0x38] sm:$0xff] %vm853, %v818
      %862 = vst.msk [vmem:[%s280 + $0x40] sm:$0xff] %vm853, %v823
      %863 = vst.msk [vmem:[%s280 + $0x48] sm:$0xff] %vm853, %v826
      %864 = vst.msk [vmem:[%s280 + $0x50] sm:$0xff] %vm853, %v831
      %865 = vst.msk [vmem:[%s280 + $0x58] sm:$0xff] %vm853, %v834
      %866 = vst.msk [vmem:[%s280 + $0x60] sm:$0xff] %vm853, %v839
      %867 = vst.msk [vmem:[%s280 + $0x68] sm:$0xff] %vm853, %v842
      %868 = vst.msk [vmem:[%s280 + $0x70] sm:$0xff] %vm853, %v847
      %869 = vst.msk [vmem:[%s280 + $0x78] sm:$0xff] %vm853, %v850
      %s870 = smul.u32 16, %s18
      %p871 = scmp.lt.s32.totalorder %s870, 31
      %s872 = scalar_select %p871, %s870, 31
      %s873 = smul.addr %s872, 8
      %s874 = scalar_lea.vmem %s7, %s873
      // Predicated region
      $region49: #{tpu_custom_call.1} parent=47 // pred_check
        %p875 = pneg %p188
      $region50: #{tpu_custom_call.1} parent=47 // pred_check_branch
        %877 = sbr.rel (%p875) target = $region52
      $region51: #{tpu_custom_call.1} parent=47 // pred_region
        %s878 = smul.u32 16, %s18
      $region52: #{tpu_custom_call.1} parent=47 // pred_fallthru
        _
    $region48: #{tpu_custom_call.1} parent=5 // pred_fallthru
      _
    %p879 = scmp.le.s32.totalorder 2, %s13
    // Predicated region
    $region53: #{tpu_custom_call.1} parent=5 // pred_check
      %p880 = pneg %p879
    $region54: #{tpu_custom_call.1} parent=5 // pred_check_branch
      %882 = sbr.rel (%p880) target = $region56
    $region55: #{tpu_custom_call.1} parent=5 // pred_region
      %s883 = ssub.s32 %s13, 2
      // Predicated region
      $region57: #{tpu_custom_call.1} parent=55 // pred_check
        %p884 = pneg %p194
      $region58: #{tpu_custom_call.1} parent=55 // pred_check_branch
        %886 = sbr.rel (%p884) target = $region60
      $region59: #{tpu_custom_call.1} parent=55 // pred_region
        %s887 = smul.u32 16, %s19
        %p888 = scmp.lt.s32.totalorder %s887, 31
        %s889 = scalar_select %p888, %s887, 31
        %s890 = smul.addr %s889, 8
        %s891 = scalar_lea.vmem %s7, %s890
      $region60: #{tpu_custom_call.1} parent=55 // pred_fallthru
        _
    $region56: #{tpu_custom_call.1} parent=5 // pred_fallthru
      _
  $region6: #{tpu_custom_call.1} parent=0 // loop_footer
    %s17 = sadd.s32 1, %s13
  $region7: #{tpu_custom_call.1} parent=0 // loop_footer_branch
    %12 = sbr.rel target = $region3
  $region8: #{tpu_custom_call.1} parent=0 // loop_exit
    _

</llo_original>
